<compile_context>
chip_gen: v7x
topology: tpu7x:2x2x1
jax: 0.10.0
libtpu: 0.0.40
codegen_flags: <defaults>
</compile_context>

<pallas_src>
import functools

import jax
import jax.numpy as jnp
from jax.experimental import pallas as pl
from jax.experimental.pallas import tpu as pltpu


def _layer_norm_kernel(w_ref, b_ref, x_ref, o_ref, *, eps):
    """Layer-norm over channels for every spatial location.

    w_ref, b_ref: (C,) float32 in SMEM (per-channel scalars).
    x_ref, o_ref: (TN, C, TS, L) blocks; C is a small leading axis, spatial is
                  on (sublane, lane), so the C-reduction is pure VPU adds.
    """
    C = x_ref.shape[1]
    inv_c = 1.0 / C

    # One sweep over channels: sum and sum-of-squares (var = E[x^2] - mean^2,
    # fp32 accumulation; biased variance, matching F.layer_norm).
    x0 = x_ref[:, 0].astype(jnp.float32)
    acc = x0
    acc_sq = x0 * x0
    for c in range(1, C):                       # static unroll, C is small
        xc = x_ref[:, c].astype(jnp.float32)
        acc = acc + xc
        acc_sq = acc_sq + xc * xc
    mean = acc * inv_c
    var = acc_sq * inv_c - mean * mean
    inv_std = jax.lax.rsqrt(var + eps)          # EUP slot -> effectively free

    # Per-channel affine as scalar*tile + scalar (SMEM scalars splat for free);
    # each store is a lane-dense (TN, TS, L) slab.
    for c in range(C):
        xc = x_ref[:, c].astype(jnp.float32)
        yc = (xc - mean) * inv_std
        o_ref[:, c] = (w_ref[c] * yc + b_ref[c]).astype(o_ref.dtype)


def layer_norm_1d(x, weight, bias, *, eps=1e-5, target_block_bytes=2 * 1024 * 1024):
    """Pallas equivalent of LayerNorm1D.forward for NCHW input (normalize over C)."""
    N, C, H, W = x.shape
    HW = H * W
    itemsize = x.dtype.itemsize

    # Free reshape of the contiguous spatial axes: put a multiple of 128 on the
    # lane axis when possible so vregs/stores are lane-dense; otherwise keep the
    # native (H, W) tiling.  Never a transpose, never an extra HBM pass.
    if HW % 128 == 0:
        L = 128
        S = HW // 128
    else:
        S, L = H, W
    x4 = x.reshape(N, C, S, L)

    # Spatial (sublane) tile: full S unless a single sample exceeds the budget.
    per_sample = C * S * L * itemsize
    if per_sample > target_block_bytes and S % 8 == 0 and S > 8:
        ts = min(S, max(8, (target_block_bytes // (C * L * itemsize)) // 8 * 8))
    else:
        ts = S

    # Batch tile: pack samples up to ~target_block_bytes per block (MiB-scale
    # blocks amortize the ~0.35us per-grid-step overhead) ...
    tn = max(1, min(N, target_block_bytes // max(C * ts * L * itemsize, 1)))
    # ... but keep a few grid steps when possible so the pipeline overlaps DMA
    # and the work shards across v7x's two TensorCores (neutral on v5e/v6e).
    if ts == S:
        tn = min(tn, max(1, pl.cdiv(N, 4)))

    grid = (pl.cdiv(N, tn), pl.cdiv(S, ts))
    block = (tn, C, ts, L)

    kernel = functools.partial(_layer_norm_kernel, eps=eps)

    out4 = pl.pallas_call(
        kernel,
        out_shape=jax.ShapeDtypeStruct((N, C, S, L), x.dtype),
        grid_spec=pltpu.PrefetchScalarGridSpec(
            num_scalar_prefetch=0,
            grid=grid,
            in_specs=[
                pl.BlockSpec(memory_space=pltpu.MemorySpace.SMEM),  # weight (C,)
                pl.BlockSpec(memory_space=pltpu.MemorySpace.SMEM),  # bias   (C,)
                pl.BlockSpec(block, lambda n, s: (n, 0, s, 0)),
            ],
            out_specs=pl.BlockSpec(block, lambda n, s: (n, 0, s, 0)),
        ),
        compiler_params=pltpu.CompilerParams(
            dimension_semantics=("parallel", "parallel"),
            # Double-buffered in + out at <=2 MiB blocks is ~8 MiB: raise the
            # scoped limit above v5e's 16 MiB default while staying well under
            # v7x's 64 MiB physical VMEM.
            vmem_limit_bytes=32 * 1024 * 1024,
        ),
    )(weight, bias, x4)

    # Free reshape back to NCHW (same contiguous spatial axes).
    return out4.reshape(N, C, H, W)


def _reference(x, weight, bias, eps=1e-5):
    # Pure-JAX reference matching the PyTorch forward (two-pass variance).
    x32 = x.astype(jnp.float32)
    mean = jnp.mean(x32, axis=1, keepdims=True)
    var = jnp.mean((x32 - mean) ** 2, axis=1, keepdims=True)
    y = (x32 - mean) / jnp.sqrt(var + eps)
    return (weight[None, :, None, None] * y + bias[None, :, None, None]).astype(x.dtype)


if __name__ == "__main__":
    key = jax.random.PRNGKey(0)
    N, C, H, W = 2, 4, 16, 16
    kx, kw, kb = jax.random.split(key, 3)
    x = jax.random.normal(kx, (N, C, H, W), dtype=jnp.float32)

    # Module init matching reset_parameters(): ones / zeros.
    weight = jnp.ones((C,), dtype=jnp.float32)
    bias = jnp.zeros((C,), dtype=jnp.float32)

    out = jax.block_until_ready(layer_norm_1d(x, weight, bias, eps=1e-5))
    ref = _reference(x, weight, bias, eps=1e-5)
    assert out.shape == (N, C, H, W)
    assert jnp.allclose(out, ref, atol=1e-5, rtol=1e-5)

    # Also exercise a non-trivial affine to validate the per-channel path.
    weight2 = jax.random.normal(kw, (C,), dtype=jnp.float32)
    bias2 = jax.random.normal(kb, (C,), dtype=jnp.float32)
    out2 = jax.block_until_ready(layer_norm_1d(x, weight2, bias2, eps=1e-5))
    ref2 = _reference(x, weight2, bias2, eps=1e-5)
    assert jnp.allclose(out2, ref2, atol=1e-5, rtol=1e-5)

    print("KERNEL_OK")
</pallas_src>

<mosaic_0001>
module attributes {stable_mosaic.version = 11 : i64} {
  func.func @_layer_norm_kernel(%arg0: i32, %arg1: i32, %arg2: memref<4xf32, #tpu.memory_space<smem>>, %arg3: memref<4xf32, #tpu.memory_space<smem>>, %arg4: memref<1x4x2x128xf32, #tpu.memory_space<vmem>>, %arg5: memref<1x4x2x128xf32, #tpu.memory_space<vmem>>) attributes {dimension_semantics = [#tpu.dimension_semantics<parallel>, #tpu.dimension_semantics<parallel>], iteration_bounds = array<i64: 2, 1>, scalar_prefetch = 0 : i64, scratch_operands = 0 : i64, tpu.core_type = #tpu.core_type<tc>, window_params = [{transform_indices = @transform_0, window_bounds = array<i64: 4>}, {transform_indices = @transform_1, window_bounds = array<i64: 4>}, {transform_indices = @transform_2, window_bounds = array<i64: 1, 4, 2, 128>}, {transform_indices = @transform_3, window_bounds = array<i64: 1, 4, 2, 128>}]} {
    %c0 = arith.constant 0 : index
    %c0_0 = arith.constant 0 : index
    %c0_1 = arith.constant 0 : index
    %c0_2 = arith.constant 0 : index
    %0 = vector.load %arg4[%c0, %c0_0, %c0_1, %c0_2] : memref<1x4x2x128xf32, #tpu.memory_space<vmem>>, vector<1x1x2x128xf32>
    %1 = vector.shape_cast %0 : vector<1x1x2x128xf32> to vector<1x2x128xf32>
    %2 = arith.mulf %1, %1 : vector<1x2x128xf32>
    %c0_3 = arith.constant 0 : index
    %c1 = arith.constant 1 : index
    %c0_4 = arith.constant 0 : index
    %c0_5 = arith.constant 0 : index
    %3 = vector.load %arg4[%c0_3, %c1, %c0_4, %c0_5] : memref<1x4x2x128xf32, #tpu.memory_space<vmem>>, vector<1x1x2x128xf32>
    %4 = vector.shape_cast %3 : vector<1x1x2x128xf32> to vector<1x2x128xf32>
    %5 = arith.addf %1, %4 : vector<1x2x128xf32>
    %6 = arith.mulf %4, %4 : vector<1x2x128xf32>
    %7 = arith.addf %2, %6 : vector<1x2x128xf32>
    %c0_6 = arith.constant 0 : index
    %c2 = arith.constant 2 : index
    %c0_7 = arith.constant 0 : index
    %c0_8 = arith.constant 0 : index
    %8 = vector.load %arg4[%c0_6, %c2, %c0_7, %c0_8] : memref<1x4x2x128xf32, #tpu.memory_space<vmem>>, vector<1x1x2x128xf32>
    %9 = vector.shape_cast %8 : vector<1x1x2x128xf32> to vector<1x2x128xf32>
    %10 = arith.addf %5, %9 : vector<1x2x128xf32>
    %11 = arith.mulf %9, %9 : vector<1x2x128xf32>
    %12 = arith.addf %7, %11 : vector<1x2x128xf32>
    %c0_9 = arith.constant 0 : index
    %c3 = arith.constant 3 : index
    %c0_10 = arith.constant 0 : index
    %c0_11 = arith.constant 0 : index
    %13 = vector.load %arg4[%c0_9, %c3, %c0_10, %c0_11] : memref<1x4x2x128xf32, #tpu.memory_space<vmem>>, vector<1x1x2x128xf32>
    %14 = vector.shape_cast %13 : vector<1x1x2x128xf32> to vector<1x2x128xf32>
    %15 = arith.addf %10, %14 : vector<1x2x128xf32>
    %16 = arith.mulf %14, %14 : vector<1x2x128xf32>
    %17 = arith.addf %12, %16 : vector<1x2x128xf32>
    %cst = arith.constant 2.500000e-01 : f32
    %18 = vector.broadcast %cst : f32 to vector<1x2x128xf32>
    %19 = arith.mulf %15, %18 : vector<1x2x128xf32>
    %cst_12 = arith.constant 2.500000e-01 : f32
    %20 = vector.broadcast %cst_12 : f32 to vector<1x2x128xf32>
    %21 = arith.mulf %17, %20 : vector<1x2x128xf32>
    %22 = arith.mulf %19, %19 : vector<1x2x128xf32>
    %23 = arith.subf %21, %22 : vector<1x2x128xf32>
    %cst_13 = arith.constant 9.99999974E-6 : f32
    %24 = vector.broadcast %cst_13 : f32 to vector<1x2x128xf32>
    %25 = arith.addf %23, %24 : vector<1x2x128xf32>
    %26 = math.rsqrt %25 : vector<1x2x128xf32>
    %c0_14 = arith.constant 0 : index
    %c0_15 = arith.constant 0 : index
    %c0_16 = arith.constant 0 : index
    %c0_17 = arith.constant 0 : index
    %27 = vector.load %arg4[%c0_14, %c0_15, %c0_16, %c0_17] : memref<1x4x2x128xf32, #tpu.memory_space<vmem>>, vector<1x1x2x128xf32>
    %28 = vector.shape_cast %27 : vector<1x1x2x128xf32> to vector<1x2x128xf32>
    %29 = arith.subf %28, %19 : vector<1x2x128xf32>
    %30 = arith.mulf %29, %26 : vector<1x2x128xf32>
    %c0_18 = arith.constant 0 : index
    %31 = memref.load %arg2[%c0_18] : memref<4xf32, #tpu.memory_space<smem>>
    %32 = vector.broadcast %31 : f32 to vector<1x2x128xf32>
    %33 = arith.mulf %32, %30 : vector<1x2x128xf32>
    %c0_19 = arith.constant 0 : index
    %34 = memref.load %arg3[%c0_19] : memref<4xf32, #tpu.memory_space<smem>>
    %35 = vector.broadcast %34 : f32 to vector<1x2x128xf32>
    %36 = arith.addf %33, %35 : vector<1x2x128xf32>
    %c0_20 = arith.constant 0 : index
    %c0_21 = arith.constant 0 : index
    %c0_22 = arith.constant 0 : index
    %c0_23 = arith.constant 0 : index
    %37 = vector.load %arg5[%c0_20, %c0_21, %c0_22, %c0_23] : memref<1x4x2x128xf32, #tpu.memory_space<vmem>>, vector<1x1x2x128xf32>
    %38 = vector.shape_cast %37 : vector<1x1x2x128xf32> to vector<1x2x128xf32>
    %39 = vector.shape_cast %36 : vector<1x2x128xf32> to vector<1x1x2x128xf32>
    tpu.vector_store %arg5[%c0_20, %c0_21, %c0_22, %c0_23], %39 {strides = array<i32>} : memref<1x4x2x128xf32, #tpu.memory_space<vmem>>, vector<1x1x2x128xf32>,
    %c0_24 = arith.constant 0 : index
    %c1_25 = arith.constant 1 : index
    %c0_26 = arith.constant 0 : index
    %c0_27 = arith.constant 0 : index
    %40 = vector.load %arg4[%c0_24, %c1_25, %c0_26, %c0_27] : memref<1x4x2x128xf32, #tpu.memory_space<vmem>>, vector<1x1x2x128xf32>
    %41 = vector.shape_cast %40 : vector<1x1x2x128xf32> to vector<1x2x128xf32>
    %42 = arith.subf %41, %19 : vector<1x2x128xf32>
    %43 = arith.mulf %42, %26 : vector<1x2x128xf32>
    %c1_28 = arith.constant 1 : index
    %44 = memref.load %arg2[%c1_28] : memref<4xf32, #tpu.memory_space<smem>>
    %45 = vector.broadcast %44 : f32 to vector<1x2x128xf32>
    %46 = arith.mulf %45, %43 : vector<1x2x128xf32>
    %c1_29 = arith.constant 1 : index
    %47 = memref.load %arg3[%c1_29] : memref<4xf32, #tpu.memory_space<smem>>
    %48 = vector.broadcast %47 : f32 to vector<1x2x128xf32>
    %49 = arith.addf %46, %48 : vector<1x2x128xf32>
    %c0_30 = arith.constant 0 : index
    %c1_31 = arith.constant 1 : index
    %c0_32 = arith.constant 0 : index
    %c0_33 = arith.constant 0 : index
    %50 = vector.load %arg5[%c0_30, %c1_31, %c0_32, %c0_33] : memref<1x4x2x128xf32, #tpu.memory_space<vmem>>, vector<1x1x2x128xf32>
    %51 = vector.shape_cast %50 : vector<1x1x2x128xf32> to vector<1x2x128xf32>
    %52 = vector.shape_cast %49 : vector<1x2x128xf32> to vector<1x1x2x128xf32>
    tpu.vector_store %arg5[%c0_30, %c1_31, %c0_32, %c0_33], %52 {strides = array<i32>} : memref<1x4x2x128xf32, #tpu.memory_space<vmem>>, vector<1x1x2x128xf32>,
    %c0_34 = arith.constant 0 : index
    %c2_35 = arith.constant 2 : index
    %c0_36 = arith.constant 0 : index
    %c0_37 = arith.constant 0 : index
    %53 = vector.load %arg4[%c0_34, %c2_35, %c0_36, %c0_37] : memref<1x4x2x128xf32, #tpu.memory_space<vmem>>, vector<1x1x2x128xf32>
    %54 = vector.shape_cast %53 : vector<1x1x2x128xf32> to vector<1x2x128xf32>
    %55 = arith.subf %54, %19 : vector<1x2x128xf32>
    %56 = arith.mulf %55, %26 : vector<1x2x128xf32>
    %c2_38 = arith.constant 2 : index
    %57 = memref.load %arg2[%c2_38] : memref<4xf32, #tpu.memory_space<smem>>
    %58 = vector.broadcast %57 : f32 to vector<1x2x128xf32>
    %59 = arith.mulf %58, %56 : vector<1x2x128xf32>
    %c2_39 = arith.constant 2 : index
    %60 = memref.load %arg3[%c2_39] : memref<4xf32, #tpu.memory_space<smem>>
    %61 = vector.broadcast %60 : f32 to vector<1x2x128xf32>
    %62 = arith.addf %59, %61 : vector<1x2x128xf32>
    %c0_40 = arith.constant 0 : index
    %c2_41 = arith.constant 2 : index
    %c0_42 = arith.constant 0 : index
    %c0_43 = arith.constant 0 : index
    %63 = vector.load %arg5[%c0_40, %c2_41, %c0_42, %c0_43] : memref<1x4x2x128xf32, #tpu.memory_space<vmem>>, vector<1x1x2x128xf32>
    %64 = vector.shape_cast %63 : vector<1x1x2x128xf32> to vector<1x2x128xf32>
    %65 = vector.shape_cast %62 : vector<1x2x128xf32> to vector<1x1x2x128xf32>
    tpu.vector_store %arg5[%c0_40, %c2_41, %c0_42, %c0_43], %65 {strides = array<i32>} : memref<1x4x2x128xf32, #tpu.memory_space<vmem>>, vector<1x1x2x128xf32>,
    %c0_44 = arith.constant 0 : index
    %c3_45 = arith.constant 3 : index
    %c0_46 = arith.constant 0 : index
    %c0_47 = arith.constant 0 : index
    %66 = vector.load %arg4[%c0_44, %c3_45, %c0_46, %c0_47] : memref<1x4x2x128xf32, #tpu.memory_space<vmem>>, vector<1x1x2x128xf32>
    %67 = vector.shape_cast %66 : vector<1x1x2x128xf32> to vector<1x2x128xf32>
    %68 = arith.subf %67, %19 : vector<1x2x128xf32>
    %69 = arith.mulf %68, %26 : vector<1x2x128xf32>
    %c3_48 = arith.constant 3 : index
    %70 = memref.load %arg2[%c3_48] : memref<4xf32, #tpu.memory_space<smem>>
    %71 = vector.broadcast %70 : f32 to vector<1x2x128xf32>
    %72 = arith.mulf %71, %69 : vector<1x2x128xf32>
    %c3_49 = arith.constant 3 : index
    %73 = memref.load %arg3[%c3_49] : memref<4xf32, #tpu.memory_space<smem>>
    %74 = vector.broadcast %73 : f32 to vector<1x2x128xf32>
    %75 = arith.addf %72, %74 : vector<1x2x128xf32>
    %c0_50 = arith.constant 0 : index
    %c3_51 = arith.constant 3 : index
    %c0_52 = arith.constant 0 : index
    %c0_53 = arith.constant 0 : index
    %76 = vector.load %arg5[%c0_50, %c3_51, %c0_52, %c0_53] : memref<1x4x2x128xf32, #tpu.memory_space<vmem>>, vector<1x1x2x128xf32>
    %77 = vector.shape_cast %76 : vector<1x1x2x128xf32> to vector<1x2x128xf32>
    %78 = vector.shape_cast %75 : vector<1x2x128xf32> to vector<1x1x2x128xf32>
    tpu.vector_store %arg5[%c0_50, %c3_51, %c0_52, %c0_53], %78 {strides = array<i32>} : memref<1x4x2x128xf32, #tpu.memory_space<vmem>>, vector<1x1x2x128xf32>,
    return
  }
  func.func @transform_0(%arg0: i32, %arg1: i32) -> i32 {
    %c0_i32 = arith.constant 0 : i32
    %c0_i32_0 = arith.constant 0 : i32
    return %c0_i32 : i32
  }
  func.func @transform_1(%arg0: i32, %arg1: i32) -> i32 {
    %c0_i32 = arith.constant 0 : i32
    %c0_i32_0 = arith.constant 0 : i32
    return %c0_i32 : i32
  }
  func.func @transform_2(%arg0: i32, %arg1: i32) -> (i32, i32, i32, i32) {
    %c0_i32 = arith.constant 0 : i32
    %c0_i32_0 = arith.constant 0 : i32
    %c0_i32_1 = arith.constant 0 : i32
    return %arg0, %c0_i32, %arg1, %c0_i32_0 : i32, i32, i32, i32
  }
  func.func @transform_3(%arg0: i32, %arg1: i32) -> (i32, i32, i32, i32) {
    %c0_i32 = arith.constant 0 : i32
    %c0_i32_0 = arith.constant 0 : i32
    %c0_i32_1 = arith.constant 0 : i32
    return %arg0, %c0_i32, %arg1, %c0_i32_0 : i32, i32, i32, i32
  }
}

</mosaic_0001>

<llo_original>
// kernel: tpu_custom_call.1
$region0: #{tpu_custom_call.1}
  #allocation0 [shape = 'u32[]', space=smem, size = 0x4, offset = 0x4, fixed_abs, tag = 'smem constant byte address 0x4 - core index']
  #allocation1 [shape = 'u32[144,128]{1,0:T(1,128)}', space=vmem, size = 0x12000, scoped, tag = 'internal scratch']
  %s0 = inlined_call_operand.hbm [shape: f32[4], index: 0, kind: input, shape index: {}]
  %s1 = inlined_call_operand.vmem [shape: f32[4], index: 1, kind: input, shape index: {}]
  %s2 = inlined_call_operand.hbm [shape: f32[2,4,2,128], index: 2, kind: input, shape index: {}]
  %s3 = inlined_call_operand.hbm [shape: f32[2,4,2,128], index: 3, kind: output, shape index: {}]
  %s4 = sld [smem:[#allocation0]]
  $region57: #{tpu_custom_call.1} parent=0
    _
  %s6 = ssub.s32 1, %s4
  %s7 = scalar_select 0, %s6, %s4
  $region1: #{tpu_custom_call.1} parent=0
    #allocation2 [shape = 'u8[512]{0}', space=smem, size = 0x200, scoped, tag = 'input window, operand 0, single buffered']
    #allocation3 [shape = 's32[2]{0}', space=sflag, size = 0x8, scoped, tag = 'scoped memory for tpu_custom_call.1']
    #allocation4 [shape = 's32[2]{0}', space=sflag, size = 0x8, scoped, tag = 'scoped memory for tpu_custom_call.1']
    #allocation5 [shape = 's32[2]{0}', space=sflag, size = 0x8, scoped, tag = 'scoped memory for tpu_custom_call.1']
    #allocation6 [shape = 's32[2]{0}', space=sflag, size = 0x8, scoped, tag = 'scoped memory for tpu_custom_call.1']
    #allocation7 [shape = 'u8[512]{0}', space=smem, size = 0x200, scoped, tag = 'input window, operand 1, single buffered']
    #allocation8 [shape = 'u8[8192]{0}', space=vmem, size = 0x2000, scoped, tag = 'input window, operand 2']
    #allocation9 [shape = 'u8[8192]{0}', space=vmem, size = 0x2000, scoped, tag = 'output window, operand 0']
    %8 = vsyncpa [#allocation5], 0
    %9 = vsyncpa [#allocation6], 0
    %10 = vsyncpa [#allocation3], 0
    %s11 = scalar_lea.sflag [#allocation3], 1
    %12 = vsyncpa %s11, 0
    %13 = vsyncpa [#allocation4], 0
    %s14 = scalar_lea.sflag [#allocation4], 1
    %15 = vsyncpa %s14, 0
    loop: start=0, step=1, limit=4
    $region2: #{tpu_custom_call.1} parent=1 // loop_pre_header
      _
    $region3: #{tpu_custom_call.1} parent=1 // loop_header
      %s17 = sphi 0, %s21
      %p18 = scmp.ge.s32.totalorder %s17, 4
      %s24 = sphi 0, %s36
      %s25 = sphi 0, %s32
      %s26 = sphi 0, %s24
      %s27 = sphi 0, %s25
      %s28 = sphi 0, %s26
      %s29 = sphi 0, %s27
      %s37 = sphi 0, %s37
      %s39 = sphi 0, %s37
      %s40 = sphi 0, %s39
      %s54 = sphi 0, %s40
      %s58 = sphi 0, %s58
      %s60 = sphi 0, %s58
      %s61 = sphi 0, %s60
      %s75 = sphi 0, %s61
      %s83 = sphi 0, %s85
      %s86 = sphi 0, %s83
      %s87 = sphi 0, %s86
      %s103 = sphi 0, %s87
      %s111 = sphi 0, %s113
      %s114 = sphi 0, %s111
      %s115 = sphi 0, %s114
      %s131 = sphi 0, %s115
    $region4: #{tpu_custom_call.1} parent=1 // loop_header_branch
      %20 = sbr.rel (%p18) target = $region8
    $region5: #{tpu_custom_call.1} parent=1 // loop_body
      %s22 = ssub.s32 %s17, 1
      %s23 = ssub.s32 %s17, 2
      %s30 = sadd.s32 1, %s25
      %p31 = scmp.ge.s32.totalorder %s30, 1
      %s32 = scalar_select %p31, 0, %s30
      %s33 = sadd.s32 1, %s24
      %s34 = scalar_select %p31, %s33, %s24
      %p35 = scmp.ge.s32.totalorder %s34, 2
      %s36 = scalar_select %p35, 0, %s34
      %s38 = sadd.s32 %s37, 1
      %p41 = scmp.eq.s32.totalorder %s17, 1
      %p42 = scmp.ne.s32.totalorder %s37, %s39
      %p43 = scmp.eq.s32.totalorder %s17, 0
      %p44 = por %p42, %p43
      %p45 = scmp.ne.s32.totalorder %s37, %s39
      %p46 = scmp.eq.s32.totalorder %s22, 1
      %p47 = por %p45, %p46
      %p48 = scmp.ne.s32.totalorder %s39, %s40
      %p49 = scmp.eq.s32.totalorder %s22, 0
      %p50 = por %p48, %p49
      %p51 = scmp.ne.s32.totalorder %s39, %s40
      %p52 = scmp.eq.s32.totalorder %s23, 1
      %p53 = por %p51, %p52
      %p55 = scmp.ne.s32.totalorder %s40, %s54
      %p56 = scmp.eq.s32.totalorder %s23, 0
      %p57 = por %p55, %p56
      %s59 = sadd.s32 %s58, 1
      %p62 = scmp.eq.s32.totalorder %s17, 1
      %p63 = scmp.ne.s32.totalorder %s58, %s60
      %p64 = scmp.eq.s32.totalorder %s17, 0
      %p65 = por %p63, %p64
      %p66 = scmp.ne.s32.totalorder %s58, %s60
      %p67 = scmp.eq.s32.totalorder %s22, 1
      %p68 = por %p66, %p67
      %p69 = scmp.ne.s32.totalorder %s60, %s61
      %p70 = scmp.eq.s32.totalorder %s22, 0
      %p71 = por %p69, %p70
      %p72 = scmp.ne.s32.totalorder %s60, %s61
      %p73 = scmp.eq.s32.totalorder %s23, 1
      %p74 = por %p72, %p73
      %p76 = scmp.ne.s32.totalorder %s61, %s75
      %p77 = scmp.eq.s32.totalorder %s23, 0
      %p78 = por %p76, %p77
      %s79 = ssub.s32 %s24, %s36
      %s80 = ssub.s32 %s25, %s32
      %s81 = sor.u32 %s79, %s80
      %p82 = scmp.eq.s32.totalorder %s81, 0
      %s84 = sadd.s32 %s83, 1
      %s85 = scalar_select %p82, %s83, %s84
      %p88 = pneg %p82
      %p89 = scmp.eq.s32.totalorder %s17, 1
      %p90 = por %p88, %p89
      %p91 = scmp.ne.s32.totalorder %s83, %s86
      %p92 = scmp.eq.s32.totalorder %s17, 0
      %p93 = por %p91, %p92
      %p94 = scmp.ne.s32.totalorder %s83, %s86
      %p95 = scmp.eq.s32.totalorder %s22, 1
      %p96 = por %p94, %p95
      %p97 = scmp.ne.s32.totalorder %s86, %s87
      %p98 = scmp.eq.s32.totalorder %s22, 0
      %p99 = por %p97, %p98
      %p100 = scmp.ne.s32.totalorder %s86, %s87
      %p101 = scmp.eq.s32.totalorder %s23, 1
      %p102 = por %p100, %p101
      %p104 = scmp.ne.s32.totalorder %s87, %s103
      %p105 = scmp.eq.s32.totalorder %s23, 0
      %p106 = por %p104, %p105
      %s107 = ssub.s32 %s24, %s36
      %s108 = ssub.s32 %s25, %s32
      %s109 = sor.u32 %s107, %s108
      %p110 = scmp.eq.s32.totalorder %s109, 0
      %s112 = sadd.s32 %s111, 1
      %s113 = scalar_select %p110, %s111, %s112
      %p116 = pneg %p110
      %p117 = scmp.eq.s32.totalorder %s17, 1
      %p118 = por %p116, %p117
      %p119 = scmp.ne.s32.totalorder %s111, %s114
      %p120 = scmp.eq.s32.totalorder %s17, 0
      %p121 = por %p119, %p120
      %p122 = scmp.ne.s32.totalorder %s111, %s114
      %p123 = scmp.eq.s32.totalorder %s22, 1
      %p124 = por %p122, %p123
      %p125 = scmp.ne.s32.totalorder %s114, %s115
      %p126 = scmp.eq.s32.totalorder %s22, 0
      %p127 = por %p125, %p126
      %p128 = scmp.ne.s32.totalorder %s114, %s115
      %p129 = scmp.eq.s32.totalorder %s23, 1
      %p130 = por %p128, %p129
      %p132 = scmp.ne.s32.totalorder %s115, %s131
      %p133 = scmp.eq.s32.totalorder %s23, 0
      %p134 = por %p132, %p133
      %p135 = scmp.le.s32.totalorder 1, %s17
      %p136 = scmp.lt.s32.totalorder %s17, 3
      %p137 = pnand %p135, %p136
      %p138 = pneg %p137
      // Predicated region
      $region9: #{tpu_custom_call.1} parent=5 // pred_check
        _
      $region10: #{tpu_custom_call.1} parent=5 // pred_check_branch
        %140 = sbr.rel (%p137) target = $region12
      $region11: #{tpu_custom_call.1} parent=5 // pred_region
        %s141 = ssub.s32 %s17, 1
        // Predicated region
        $region13: #{tpu_custom_call.1} parent=11 // pred_check
          %p142 = pneg %p50
        $region14: #{tpu_custom_call.1} parent=11 // pred_check_branch
          %144 = sbr.rel (%p142) target = $region16
        $region15: #{tpu_custom_call.1} parent=11 // pred_region
          %s146 = ssub.s32 16, 16
          %147 = vsyncadd [#allocation5], %s146
          %150 = dma.hbm_to_smem %s0, 16, [#allocation2], [#allocation5]
        $region16: #{tpu_custom_call.1} parent=11 // pred_fallthru
          _
        // Predicated region
        $region17: #{tpu_custom_call.1} parent=11 // pred_check
          %p151 = pneg %p71
        $region18: #{tpu_custom_call.1} parent=11 // pred_check_branch
          %153 = sbr.rel (%p151) target = $region20
        $region19: #{tpu_custom_call.1} parent=11 // pred_region
          %s155 = ssub.s32 16, 16
          %156 = vsyncadd [#allocation6], %s155
          %s158 = sshll.u32 %s1, 4
          %s159 = int_to_ptr.vmem [resolvable:$true] %s158
          %161 = dma.vmem_to_smem %s159, 16, [#allocation7], [#allocation6]
        $region20: #{tpu_custom_call.1} parent=11 // pred_fallthru
          _
      $region12: #{tpu_custom_call.1} parent=5 // pred_fallthru
        _
      %p162 = scmp.lt.s32.totalorder %s17, 2
      // Predicated region
      $region21: #{tpu_custom_call.1} parent=5 // pred_check
        %p163 = pneg %p162
      $region22: #{tpu_custom_call.1} parent=5 // pred_check_branch
        %165 = sbr.rel (%p163) target = $region24
      $region23: #{tpu_custom_call.1} parent=5 // pred_region
        // Predicated region
        $region25: #{tpu_custom_call.1} parent=23 // pred_check
          %p166 = pneg %p93
        $region26: #{tpu_custom_call.1} parent=23 // pred_check_branch
          %168 = sbr.rel (%p166) target = $region28
        $region27: #{tpu_custom_call.1} parent=23 // pred_region
          %s169 = sand.u32 %s83, 1
          %s170 = scalar_lea.sflag [#allocation3], %s169
          %s171 = sand.u32 %s83, 1
          %s172 = smul.addr %s171, 8
          %s173 = scalar_lea.vmem [#allocation8], %s172
          %s175 = ssub.s32 128, 128
          %176 = vsyncadd %s170, %s175
          %s177 = smul.addr %s24, 4
          %s178 = sadd.s32 %s25, %s177
          %s179 = smul.addr %s178, 32
          %s180 = scalar_lea.hbm %s2, %s179
          %s181 = sshll.u32 %s173, 4
          %s182 = int_to_ptr.vmem [resolvable:$true] %s181
          %187 = dma.hbm_to_vmem [thread:$0]  %s180, 128, %s182, %s170, 32, 32, 2
        $region28: #{tpu_custom_call.1} parent=23 // pred_fallthru
          _
      $region24: #{tpu_custom_call.1} parent=5 // pred_fallthru
        _
      %p188 = scmp.le.s32.totalorder 1, %s17
      %p189 = scmp.lt.s32.totalorder %s17, 3
      %p190 = pnand %p188, %p189
      %p191 = pneg %p190
      // Predicated region
      $region29: #{tpu_custom_call.1} parent=5 // pred_check
        _
      $region30: #{tpu_custom_call.1} parent=5 // pred_check_branch
        %193 = sbr.rel (%p190) target = $region32
      $region31: #{tpu_custom_call.1} parent=5 // pred_region
        %s194 = ssub.s32 %s17, 1
        // Predicated region
        $region33: #{tpu_custom_call.1} parent=31 // pred_check
          %p195 = pneg %p50
        $region34: #{tpu_custom_call.1} parent=31 // pred_check_branch
          %197 = sbr.rel (%p195) target = $region36
        $region35: #{tpu_custom_call.1} parent=31 // pred_region
          %198 = dma.done [#allocation5], 16
        $region36: #{tpu_custom_call.1} parent=31 // pred_fallthru
          _
        // Predicated region
        $region37: #{tpu_custom_call.1} parent=31 // pred_check
          %p199 = pneg %p71
        $region38: #{tpu_custom_call.1} parent=31 // pred_check_branch
          %201 = sbr.rel (%p199) target = $region40
        $region39: #{tpu_custom_call.1} parent=31 // pred_region
          %202 = dma.done [#allocation6], 16
        $region40: #{tpu_custom_call.1} parent=31 // pred_fallthru
          _
        %s203 = sand.u32 %s86, 1
        %s204 = scalar_lea.sflag [#allocation3], %s203
        %s205 = sand.u32 %s86, 1
        %s206 = smul.addr %s205, 8
        %s207 = scalar_lea.vmem [#allocation8], %s206
        // Predicated region
        $region41: #{tpu_custom_call.1} parent=31 // pred_check
          %p208 = pneg %p99
        $region42: #{tpu_custom_call.1} parent=31 // pred_check_branch
          %210 = sbr.rel (%p208) target = $region44
        $region43: #{tpu_custom_call.1} parent=31 // pred_region
          %211 = dma.done %s204, 128
        $region44: #{tpu_custom_call.1} parent=31 // pred_fallthru
          _
        %212 = sfence
        %p213 = pneg %p50
        %p214 = pneg %p47
        %p215 = pneg %p71
        %p216 = pneg %p68
        %s217 = sand.u32 %s86, 1
        %s218 = scalar_lea.sflag [#allocation3], %s217
        %s219 = sand.u32 %s86, 1
        %s220 = smul.addr %s219, 8
        %s221 = scalar_lea.vmem [#allocation8], %s220
        %p222 = pneg %p99
        %p223 = pneg %p96
        %p224 = pneg %p127
        %p225 = pneg %p124
        %s226 = sand.u32 %s114, 1
        %s227 = scalar_lea.sflag [#allocation4], %s226
        %s228 = sand.u32 %s114, 1
        %s229 = smul.addr %s228, 8
        %s230 = scalar_lea.vmem [#allocation9], %s229
        %v231 = vld [vmem:[%s207] sm:$0x3]
        %v232 = vmul.f32 %v231, %v231
        %s233 = scalar_lea.vmem %s207, 2 [#allocation8]
        %v234 = vld [vmem:[%s233] sm:$0x3]
        %v235 = vadd.f32 %v231, %v234
        %v236 = vmul.f32 %v234, %v234
        %v237 = vadd.f32 %v232, %v236
        %s238 = scalar_lea.vmem %s207, 4 [#allocation8]
        %v239 = vld [vmem:[%s238] sm:$0x3]
        %v240 = vadd.f32 %v235, %v239
        %v241 = vmul.f32 %v239, %v239
        %v242 = vadd.f32 %v237, %v241
        %s243 = scalar_lea.vmem %s207, 6 [#allocation8]
        %v244 = vld [vmem:[%s243] sm:$0x3]
        %v245 = vadd.f32 %v240, %v244
        %v246 = vmul.f32 %v244, %v244
        %v247 = vadd.f32 %v242, %v246
        %v248 = vmul.f32 %v245, 0.25
        %v249 = vmul.f32 %v247, 0.25
        %v250 = vmul.f32 %v248, %v248
        %v251 = vsub.f32 %v249, %v250
        %v252 = vadd.f32 %v251, 1e-05
        %v253 = vrsqrt.pop %v252
        %v254 = vsub.f32 %v231, %v248
        %v255 = vmul.f32 %v254, %v253
        %s256 = sld [smem:[#allocation2]]
        %v257 = vstv %s256
        %v258 = vmul.f32 %v257, %v255
        %s259 = sld [smem:[#allocation7]]
        %v260 = vstv %s259
        %v261 = vadd.f32 %v258, %v260
        %262 = vst [vmem:[%s230] sm:$0x3] %v261
        %v263 = vld [vmem:[%s233] sm:$0x3]
        %v264 = vsub.f32 %v263, %v248
        %v265 = vmul.f32 %v264, %v253
        %s266 = sld [smem:[#allocation2 + $0x1]]
        %v267 = vstv %s266
        %v268 = vmul.f32 %v267, %v265
        %s269 = sld [smem:[#allocation7 + $0x1]]
        %v270 = vstv %s269
        %v271 = vadd.f32 %v268, %v270
        %s272 = scalar_lea.vmem %s230, 2 [#allocation9]
        %273 = vst [vmem:[%s272] sm:$0x3] %v271
        %v274 = vld [vmem:[%s238] sm:$0x3]
        %v275 = vsub.f32 %v274, %v248
        %v276 = vmul.f32 %v275, %v253
        %s277 = sld [smem:[#allocation2 + $0x2]]
        %v278 = vstv %s277
        %v279 = vmul.f32 %v278, %v276
        %s280 = sld [smem:[#allocation7 + $0x2]]
        %v281 = vstv %s280
        %v282 = vadd.f32 %v279, %v281
        %s283 = scalar_lea.vmem %s230, 4 [#allocation9]
        %284 = vst [vmem:[%s283] sm:$0x3] %v282
        %v285 = vld [vmem:[%s243] sm:$0x3]
        %v286 = vsub.f32 %v285, %v248
        %v287 = vmul.f32 %v286, %v253
        %s288 = sld [smem:[#allocation2 + $0x3]]
        %v289 = vstv %s288
        %v290 = vmul.f32 %v289, %v287
        %s291 = sld [smem:[#allocation7 + $0x3]]
        %v292 = vstv %s291
        %v293 = vadd.f32 %v290, %v292
        %s294 = scalar_lea.vmem %s230, 6 [#allocation9]
        %295 = vst [vmem:[%s294] sm:$0x3] %v293
        %s296 = sand.u32 %s114, 1
        %s297 = scalar_lea.sflag [#allocation4], %s296
        %s298 = sand.u32 %s114, 1
        %s299 = smul.addr %s298, 8
        %s300 = scalar_lea.vmem [#allocation9], %s299
        // Predicated region
        $region45: #{tpu_custom_call.1} parent=31 // pred_check
          %p301 = pneg %p124
        $region46: #{tpu_custom_call.1} parent=31 // pred_check_branch
          %303 = sbr.rel (%p301) target = $region48
        $region47: #{tpu_custom_call.1} parent=31 // pred_region
          %s305 = ssub.s32 128, 128
          %306 = vsyncadd %s297, %s305
          %s307 = smul.addr %s26, 4
          %s308 = sadd.s32 %s27, %s307
          %s309 = smul.addr %s308, 32
          %s310 = scalar_lea.hbm %s3, %s309
          %s311 = sshll.u32 %s300, 4
          %s312 = int_to_ptr.vmem [resolvable:$true] %s311
          %317 = dma.vmem_to_hbm [thread:$0]  %s312, 128, %s310, %s297, 32, 32, 2
        $region48: #{tpu_custom_call.1} parent=31 // pred_fallthru
          _
      $region32: #{tpu_custom_call.1} parent=5 // pred_fallthru
        _
      %p318 = scmp.le.s32.totalorder 2, %s17
      // Predicated region
      $region49: #{tpu_custom_call.1} parent=5 // pred_check
        %p319 = pneg %p318
      $region50: #{tpu_custom_call.1} parent=5 // pred_check_branch
        %321 = sbr.rel (%p319) target = $region52
      $region51: #{tpu_custom_call.1} parent=5 // pred_region
        %s322 = ssub.s32 %s17, 2
        // Predicated region
        $region53: #{tpu_custom_call.1} parent=51 // pred_check
          %p323 = pneg %p130
        $region54: #{tpu_custom_call.1} parent=51 // pred_check_branch
          %325 = sbr.rel (%p323) target = $region56
        $region55: #{tpu_custom_call.1} parent=51 // pred_region
          %s326 = sand.u32 %s115, 1
          %s327 = scalar_lea.sflag [#allocation4], %s326
          %s328 = sand.u32 %s115, 1
          %s329 = smul.addr %s328, 8
          %s330 = scalar_lea.vmem [#allocation9], %s329
          %331 = dma.done %s327, 128
        $region56: #{tpu_custom_call.1} parent=51 // pred_fallthru
          _
      $region52: #{tpu_custom_call.1} parent=5 // pred_fallthru
        _
    $region6: #{tpu_custom_call.1} parent=1 // loop_footer
      %s21 = sadd.s32 1, %s17
    $region7: #{tpu_custom_call.1} parent=1 // loop_footer_branch
      %16 = sbr.rel target = $region3
    $region8: #{tpu_custom_call.1} parent=1 // loop_exit
      _
    %332 = vsyncpa [#allocation3], 1
    %s333 = scalar_lea.sflag [#allocation3], 1
    %334 = vsyncpa %s333, 1
    %335 = vsyncpa [#allocation4], 1
    %s336 = scalar_lea.sflag [#allocation4], 1
    %337 = vsyncpa %s336, 1
    %338 = vsyncpa [#allocation5], 1
    %s339 = scalar_lea.sflag [#allocation5], 1
    %340 = vsyncpa %s339, 1
    %341 = vsyncpa [#allocation6], 1
    %s342 = scalar_lea.sflag [#allocation6], 1
    %343 = vsyncpa %s342, 1

</llo_original>
